<compile_context>
chip_gen: v7x
topology: tpu7x:2x2x1
jax: 0.10.0
libtpu: 0.0.40
codegen_flags: <defaults>
</compile_context>

<pallas_src>
import functools

import jax
import jax.numpy as jnp
from jax.experimental import pallas as pl
from jax.experimental.pallas import tpu as pltpu


def _shortcut_kernel(x_ref, s_ref, o_ref, *, pad_rows):
    """One grid step = B batch elements, all channels.

    x_ref : (B, C_in/p,  p*H*W)     real input channels, lane-packed & flattened
    s_ref : (p*H*W, p*Ho*Wo)        block-diag stride-2 selection matrix (VMEM)
    o_ref : (B, C_out/p, p*Ho*Wo)   lane-packed, lane-dense output tile
    """
    b, cin_rows, k = x_ref.shape
    l = s_ref.shape[1]

    # All B * C_in/p channel-rows of this step in ONE MXU matmul (fills M).
    x2d = x_ref[...].reshape(b * cin_rows, k)
    y = jnp.dot(x2d, s_ref[...], preferred_element_type=jnp.float32)
    y = y.astype(o_ref.dtype).reshape(b, cin_rows, l)

    if pad_rows > 0:
        zeros = jnp.zeros((b, pad_rows, l), o_ref.dtype)
        o_ref[:, :pad_rows, :] = zeros                       # leading zero-pad channels
        o_ref[:, pad_rows:pad_rows + cin_rows, :] = y        # real (subsampled) channels
        o_ref[:, pad_rows + cin_rows:, :] = zeros            # trailing zero-pad channels
    else:
        o_ref[...] = y


def _pick_pack_factor(c_in, pad, hw_out):
    """Largest power-of-2 p such that packing p channels per lane row makes the
    output last dim lane-dense (>=128) while p still divides c_in and pad."""
    p = 1
    while (p * hw_out < 128
           and c_in % (2 * p) == 0
           and (pad == 0 or pad % (2 * p) == 0)):
        p *= 2
    return p


def _pick_batch_tile(n, bytes_per_batch, s_bytes):
    """Largest divisor B of n whose double-buffered per-step footprint fits a
    conservative VMEM budget, keeping >= 2 grid steps when possible (so the
    'parallel' grid axis actually shards across both v7x TensorCores)."""
    budget = 12 * 1024 * 1024
    best = 1
    for b in range(1, n + 1):
        if n % b:
            continue
        if n >= 2 and n // b < 2:
            continue
        if 2 * b * bytes_per_batch + 2 * s_bytes <= budget:
            best = b
    return best


def lambda_layer_shortcut(x, planes):
    """Pallas equivalent of
    F.pad(x[:, :, ::2, ::2], (0,0, 0,0, planes//4, planes//4), 'constant', 0)."""
    n, c_in, h, w = x.shape
    pad = planes // 4
    ho, wo = (h + 1) // 2, (w + 1) // 2
    c_out = c_in + 2 * pad
    itemsize = jnp.dtype(x.dtype).itemsize

    # Lane-packing: p channels share one lane row when Ho*Wo < 128.
    p = _pick_pack_factor(c_in, pad, ho * wo)
    cin_rows, cout_rows, pad_rows = c_in // p, c_out // p, pad // p
    k, l = p * h * w, p * ho * wo

    # Block-diagonal selection matrix: packed output lane  blk*Ho*Wo + (i*Wo+j)
    # reads packed input lane  blk*H*W + (2i*W + 2j).  0/1 entries -> the f32
    # matmul is exact (each output element is x * 1.0).
    base = ((2 * jnp.arange(ho))[:, None] * w + 2 * jnp.arange(wo)[None, :]).reshape(-1)
    cols = jnp.arange(l)
    src = (cols // (ho * wo)) * (h * w) + base[cols % (ho * wo)]
    s = jnp.zeros((k, l), x.dtype).at[src, cols].set(1)

    # Free contiguous reshape: p channels per row, spatial dims lane-dense.
    x_flat = x.reshape(n, cin_rows, k)

    bytes_per_batch = (cin_rows * k + cout_rows * l) * itemsize
    bsz = _pick_batch_tile(n, bytes_per_batch, s.size * itemsize)

    kernel = functools.partial(_shortcut_kernel, pad_rows=pad_rows)

    out_flat = pl.pallas_call(
        kernel,
        out_shape=jax.ShapeDtypeStruct((n, cout_rows, l), x.dtype),
        grid_spec=pltpu.PrefetchScalarGridSpec(
            num_scalar_prefetch=0,
            grid=(n // bsz,),
            in_specs=[
                # Only the real input channels are ever read from HBM.
                pl.BlockSpec((bsz, cin_rows, k), lambda i: (i, 0, 0)),
                # Constant index_map -> S is DMA'd once and stays VMEM-resident.
                pl.BlockSpec((k, l), lambda i: (0, 0)),
            ],
            out_specs=pl.BlockSpec((bsz, cout_rows, l), lambda i: (i, 0, 0)),
        ),
        compiler_params=pltpu.CompilerParams(
            dimension_semantics=("parallel",),
        ),
    )(x_flat, s)

    # Free reshape back to NCHW.
    return out_flat.reshape(n, c_out, ho, wo)


if __name__ == "__main__":
    key = jax.random.PRNGKey(0)
    # Shapes consistent with resnet_cifar usage (shortcut doubles the channel
    # count: in_planes=4 -> planes=8, pad=2, C_out=8).
    x = jax.random.normal(key, (2, 4, 16, 16), dtype=jnp.float32)
    planes = 8

    out = lambda_layer_shortcut(x, planes)
    out = jax.block_until_ready(out)

    # Pure-JAX reference of the PyTorch lambda.
    pad = planes // 4
    ref = jnp.pad(x[:, :, ::2, ::2], ((0, 0), (pad, pad), (0, 0), (0, 0)))
    assert out.shape == ref.shape, (out.shape, ref.shape)
    assert jnp.allclose(out, ref, atol=1e-5), "mismatch vs reference"

    print("KERNEL_OK")
</pallas_src>

<mosaic_0001>
module attributes {stable_mosaic.version = 11 : i64} {
  func.func @_shortcut_kernel(%arg0: i32, %arg1: memref<1x2x512xf32, #tpu.memory_space<vmem>>, %arg2: memref<512x128xf32, #tpu.memory_space<vmem>>, %arg3: memref<1x4x128xf32, #tpu.memory_space<vmem>>) attributes {dimension_semantics = [#tpu.dimension_semantics<parallel>], iteration_bounds = array<i64: 2>, scalar_prefetch = 0 : i64, scratch_operands = 0 : i64, tpu.core_type = #tpu.core_type<tc>, window_params = [{transform_indices = @transform_0, window_bounds = array<i64: 1, 2, 512>}, {pipeline_mode = #tpu.pipeline_mode<synchronous>, transform_indices = @transform_1, window_bounds = array<i64: 512, 128>}, {transform_indices = @transform_2, window_bounds = array<i64: 1, 4, 128>}]} {
    %c0 = arith.constant 0 : index
    %c0_0 = arith.constant 0 : index
    %c0_1 = arith.constant 0 : index
    %0 = vector.load %arg1[%c0, %c0_0, %c0_1] : memref<1x2x512xf32, #tpu.memory_space<vmem>>, vector<1x2x512xf32>
    %1 = vector.shape_cast %0 : vector<1x2x512xf32> to vector<2x512xf32>
    %c0_2 = arith.constant 0 : index
    %c0_3 = arith.constant 0 : index
    %2 = vector.load %arg2[%c0_2, %c0_3] : memref<512x128xf32, #tpu.memory_space<vmem>>, vector<512x128xf32>
    %cst = arith.constant dense<0.000000e+00> : vector<2x128xf32>
    %3 = tpu.matmul %1, %2, %cst {dimension_numbers = #tpu.dot_dimension_numbers<[1], [0], [0], [1], [0, 0, 1, 1], [], []>} : vector<2x512xf32>, vector<512x128xf32>, vector<2x128xf32> -> vector<2x128xf32>
    %4 = vector.shape_cast %3 : vector<2x128xf32> to vector<1x2x128xf32>
    %cst_4 = arith.constant 0.000000e+00 : f32
    %5 = vector.broadcast %cst_4 : f32 to vector<1x1x128xf32>
    %c0_5 = arith.constant 0 : index
    %c0_6 = arith.constant 0 : index
    %c0_7 = arith.constant 0 : index
    %6 = vector.load %arg3[%c0_5, %c0_6, %c0_7] : memref<1x4x128xf32, #tpu.memory_space<vmem>>, vector<1x1x128xf32>
    tpu.vector_store %arg3[%c0_5, %c0_6, %c0_7], %5 {strides = array<i32>} : memref<1x4x128xf32, #tpu.memory_space<vmem>>, vector<1x1x128xf32>,
    %c0_8 = arith.constant 0 : index
    %c1 = arith.constant 1 : index
    %c0_9 = arith.constant 0 : index
    %7 = vector.load %arg3[%c0_8, %c1, %c0_9] : memref<1x4x128xf32, #tpu.memory_space<vmem>>, vector<1x2x128xf32>
    tpu.vector_store %arg3[%c0_8, %c1, %c0_9], %4 {strides = array<i32>} : memref<1x4x128xf32, #tpu.memory_space<vmem>>, vector<1x2x128xf32>,
    %c0_10 = arith.constant 0 : index
    %c3 = arith.constant 3 : index
    %c0_11 = arith.constant 0 : index
    %8 = vector.load %arg3[%c0_10, %c3, %c0_11] : memref<1x4x128xf32, #tpu.memory_space<vmem>>, vector<1x1x128xf32>
    tpu.vector_store %arg3[%c0_10, %c3, %c0_11], %5 {strides = array<i32>} : memref<1x4x128xf32, #tpu.memory_space<vmem>>, vector<1x1x128xf32>,
    return
  }
  func.func @transform_0(%arg0: i32) -> (i32, i32, i32) {
    %c0_i32 = arith.constant 0 : i32
    %c0_i32_0 = arith.constant 0 : i32
    %c0_i32_1 = arith.constant 0 : i32
    return %arg0, %c0_i32, %c0_i32_0 : i32, i32, i32
  }
  func.func @transform_1(%arg0: i32) -> (i32, i32) {
    %c0_i32 = arith.constant 0 : i32
    %c0_i32_0 = arith.constant 0 : i32
    %c0_i32_1 = arith.constant 0 : i32
    return %c0_i32, %c0_i32_0 : i32, i32
  }
  func.func @transform_2(%arg0: i32) -> (i32, i32, i32) {
    %c0_i32 = arith.constant 0 : i32
    %c0_i32_0 = arith.constant 0 : i32
    %c0_i32_1 = arith.constant 0 : i32
    return %arg0, %c0_i32, %c0_i32_0 : i32, i32, i32
  }
}

</mosaic_0001>

<llo_original>
// kernel: tpu_custom_call.1
$region0: #{tpu_custom_call.1}
  #allocation0 [shape = 'u32[]', space=smem, size = 0x4, offset = 0x4, fixed_abs, tag = 'smem constant byte address 0x4 - core index']
  #allocation1 [shape = 'u32[144,128]{1,0:T(1,128)}', space=vmem, size = 0x12000, scoped, tag = 'internal scratch']
  %s0 = inlined_call_operand.hbm [shape: f32[2,2,512], index: 0, kind: input, shape index: {}]
  %s1 = inlined_call_operand.hbm [shape: f32[512,128], index: 1, kind: input, shape index: {}]
  %s2 = inlined_call_operand.hbm [shape: f32[2,4,128], index: 2, kind: output, shape index: {}]
  %s3 = sld [smem:[#allocation0]]
  $region49: #{tpu_custom_call.1} parent=0
    _
  %s5 = ssub.s32 1, %s3
  %s6 = scalar_select 0, %s5, %s3
  $region1: #{tpu_custom_call.1} parent=0
    #allocation2 [shape = 'u8[8192]{0}', space=vmem, size = 0x2000, scoped, tag = 'input window, operand 0']
    #allocation3 [shape = 's32[2]{0}', space=sflag, size = 0x8, scoped, tag = 'scoped memory for tpu_custom_call.1']
    #allocation4 [shape = 's32[2]{0}', space=sflag, size = 0x8, scoped, tag = 'scoped memory for tpu_custom_call.1']
    #allocation5 [shape = 'u8[262144]{0}', space=vmem, size = 0x40000, scoped, tag = 'input window, operand 1, single buffered']
    #allocation6 [shape = 's32[1]{0}', space=sflag, size = 0x4, scoped, tag = 'scoped memory for tpu_custom_call.1']
    #allocation7 [shape = 'u8[4096]{0}', space=vmem, size = 0x1000, scoped, tag = 'output window, operand 0']
    %7 = vsyncpa [#allocation3], 0
    %s8 = scalar_lea.sflag [#allocation3], 1
    %9 = vsyncpa %s8, 0
    %10 = vsyncpa [#allocation6], 0
    %11 = vsyncpa [#allocation4], 0
    %s12 = scalar_lea.sflag [#allocation4], 1
    %13 = vsyncpa %s12, 0
    loop: start=0, step=1, limit=4
    $region2: #{tpu_custom_call.1} parent=1 // loop_pre_header
      _
    $region3: #{tpu_custom_call.1} parent=1 // loop_header
      %s15 = sphi 0, %s19
      %p16 = scmp.ge.s32.totalorder %s15, 4
      %s25 = sphi 0, %s27
      %s28 = sphi 0, %s25
      %s29 = sphi 0, %s28
      %s45 = sphi 0, %s29
      %s49 = sphi 0, %s49
      %s51 = sphi 0, %s49
      %s52 = sphi 0, %s51
      %s66 = sphi 0, %s52
      %s72 = sphi 0, %s74
      %s75 = sphi 0, %s72
      %s76 = sphi 0, %s75
      %s92 = sphi 0, %s76
    $region4: #{tpu_custom_call.1} parent=1 // loop_header_branch
      %18 = sbr.rel (%p16) target = $region8
    $region5: #{tpu_custom_call.1} parent=1 // loop_body
      %s20 = ssub.s32 %s15, 1
      %s21 = ssub.s32 %s15, 2
      %s22 = sadd.s32 %s15, 1
      %s23 = ssub.s32 %s15, %s22
      %p24 = scmp.eq.s32.totalorder %s23, 0
      %s26 = sadd.s32 %s25, 1
      %s27 = scalar_select %p24, %s25, %s26
      %p30 = pneg %p24
      %p31 = scmp.eq.s32.totalorder %s15, 1
      %p32 = por %p30, %p31
      %p33 = scmp.ne.s32.totalorder %s25, %s28
      %p34 = scmp.eq.s32.totalorder %s15, 0
      %p35 = por %p33, %p34
      %p36 = scmp.ne.s32.totalorder %s25, %s28
      %p37 = scmp.eq.s32.totalorder %s20, 1
      %p38 = por %p36, %p37
      %p39 = scmp.ne.s32.totalorder %s28, %s29
      %p40 = scmp.eq.s32.totalorder %s20, 0
      %p41 = por %p39, %p40
      %p42 = scmp.ne.s32.totalorder %s28, %s29
      %p43 = scmp.eq.s32.totalorder %s21, 1
      %p44 = por %p42, %p43
      %p46 = scmp.ne.s32.totalorder %s29, %s45
      %p47 = scmp.eq.s32.totalorder %s21, 0
      %p48 = por %p46, %p47
      %s50 = sadd.s32 %s49, 1
      %p53 = scmp.eq.s32.totalorder %s15, 1
      %p54 = scmp.ne.s32.totalorder %s49, %s51
      %p55 = scmp.eq.s32.totalorder %s15, 0
      %p56 = por %p54, %p55
      %p57 = scmp.ne.s32.totalorder %s49, %s51
      %p58 = scmp.eq.s32.totalorder %s20, 1
      %p59 = por %p57, %p58
      %p60 = scmp.ne.s32.totalorder %s51, %s52
      %p61 = scmp.eq.s32.totalorder %s20, 0
      %p62 = por %p60, %p61
      %p63 = scmp.ne.s32.totalorder %s51, %s52
      %p64 = scmp.eq.s32.totalorder %s21, 1
      %p65 = por %p63, %p64
      %p67 = scmp.ne.s32.totalorder %s52, %s66
      %p68 = scmp.eq.s32.totalorder %s21, 0
      %p69 = por %p67, %p68
      %s70 = ssub.s32 %s15, %s22
      %p71 = scmp.eq.s32.totalorder %s70, 0
      %s73 = sadd.s32 %s72, 1
      %s74 = scalar_select %p71, %s72, %s73
      %p77 = pneg %p71
      %p78 = scmp.eq.s32.totalorder %s15, 1
      %p79 = por %p77, %p78
      %p80 = scmp.ne.s32.totalorder %s72, %s75
      %p81 = scmp.eq.s32.totalorder %s15, 0
      %p82 = por %p80, %p81
      %p83 = scmp.ne.s32.totalorder %s72, %s75
      %p84 = scmp.eq.s32.totalorder %s20, 1
      %p85 = por %p83, %p84
      %p86 = scmp.ne.s32.totalorder %s75, %s76
      %p87 = scmp.eq.s32.totalorder %s20, 0
      %p88 = por %p86, %p87
      %p89 = scmp.ne.s32.totalorder %s75, %s76
      %p90 = scmp.eq.s32.totalorder %s21, 1
      %p91 = por %p89, %p90
      %p93 = scmp.ne.s32.totalorder %s76, %s92
      %p94 = scmp.eq.s32.totalorder %s21, 0
      %p95 = por %p93, %p94
      %p96 = scmp.le.s32.totalorder 1, %s15
      %p97 = scmp.lt.s32.totalorder %s15, 3
      %p98 = pnand %p96, %p97
      %p99 = pneg %p98
      // Predicated region
      $region9: #{tpu_custom_call.1} parent=5 // pred_check
        _
      $region10: #{tpu_custom_call.1} parent=5 // pred_check_branch
        %101 = sbr.rel (%p98) target = $region12
      $region11: #{tpu_custom_call.1} parent=5 // pred_region
        %s102 = ssub.s32 %s15, 1
        // Predicated region
        $region13: #{tpu_custom_call.1} parent=11 // pred_check
          %p103 = pneg %p62
        $region14: #{tpu_custom_call.1} parent=11 // pred_check_branch
          %105 = sbr.rel (%p103) target = $region16
        $region15: #{tpu_custom_call.1} parent=11 // pred_region
          %s107 = ssub.s32 8192, 8192
          %108 = vsyncadd [#allocation6], %s107
          %s109 = sshll.u32 [#allocation5], 4
          %s110 = int_to_ptr.vmem [resolvable:$true] %s109
          %115 = dma.hbm_to_vmem [thread:$0]  %s1, 8192, %s110, [#allocation6], 128, 128, 8
        $region16: #{tpu_custom_call.1} parent=11 // pred_fallthru
          _
      $region12: #{tpu_custom_call.1} parent=5 // pred_fallthru
        _
      %p116 = scmp.lt.s32.totalorder %s15, 2
      // Predicated region
      $region17: #{tpu_custom_call.1} parent=5 // pred_check
        %p117 = pneg %p116
      $region18: #{tpu_custom_call.1} parent=5 // pred_check_branch
        %119 = sbr.rel (%p117) target = $region20
      $region19: #{tpu_custom_call.1} parent=5 // pred_region
        // Predicated region
        $region21: #{tpu_custom_call.1} parent=19 // pred_check
          %p120 = pneg %p35
        $region22: #{tpu_custom_call.1} parent=19 // pred_check_branch
          %122 = sbr.rel (%p120) target = $region24
        $region23: #{tpu_custom_call.1} parent=19 // pred_region
          %s123 = sand.u32 %s25, 1
          %s124 = scalar_lea.sflag [#allocation3], %s123
          %s125 = sand.u32 %s25, 1
          %s126 = smul.addr %s125, 8
          %s127 = scalar_lea.vmem [#allocation2], %s126
          %s129 = ssub.s32 128, 128
          %130 = vsyncadd %s124, %s129
          %s131 = smul.addr %s15, 4
          %s132 = smul.addr %s131, 32
          %s133 = scalar_lea.hbm %s0, %s132
          %s135 = sshll.u32 %s127, 4
          %s136 = int_to_ptr.vmem [resolvable:$true] %s135
          %138 = dma.hbm_to_vmem [thread:$0]  %s133, 128, %s136, %s124
        $region24: #{tpu_custom_call.1} parent=19 // pred_fallthru
          _
      $region20: #{tpu_custom_call.1} parent=5 // pred_fallthru
        _
      %p139 = scmp.le.s32.totalorder 1, %s15
      %p140 = scmp.lt.s32.totalorder %s15, 3
      %p141 = pnand %p139, %p140
      %p142 = pneg %p141
      // Predicated region
      $region25: #{tpu_custom_call.1} parent=5 // pred_check
        _
      $region26: #{tpu_custom_call.1} parent=5 // pred_check_branch
        %144 = sbr.rel (%p141) target = $region28
      $region27: #{tpu_custom_call.1} parent=5 // pred_region
        %s145 = ssub.s32 %s15, 1
        %s146 = sand.u32 %s28, 1
        %s147 = scalar_lea.sflag [#allocation3], %s146
        %s148 = sand.u32 %s28, 1
        %s149 = smul.addr %s148, 8
        %s150 = scalar_lea.vmem [#allocation2], %s149
        // Predicated region
        $region29: #{tpu_custom_call.1} parent=27 // pred_check
          %p151 = pneg %p41
        $region30: #{tpu_custom_call.1} parent=27 // pred_check_branch
          %153 = sbr.rel (%p151) target = $region32
        $region31: #{tpu_custom_call.1} parent=27 // pred_region
          %154 = dma.done %s147, 128
        $region32: #{tpu_custom_call.1} parent=27 // pred_fallthru
          _
        // Predicated region
        $region33: #{tpu_custom_call.1} parent=27 // pred_check
          %p155 = pneg %p62
        $region34: #{tpu_custom_call.1} parent=27 // pred_check_branch
          %157 = sbr.rel (%p155) target = $region36
        $region35: #{tpu_custom_call.1} parent=27 // pred_region
          %158 = dma.done [#allocation6], 8192
        $region36: #{tpu_custom_call.1} parent=27 // pred_fallthru
          _
        %s159 = sand.u32 %s28, 1
        %s160 = scalar_lea.sflag [#allocation3], %s159
        %s161 = sand.u32 %s28, 1
        %s162 = smul.addr %s161, 8
        %s163 = scalar_lea.vmem [#allocation2], %s162
        %p164 = pneg %p41
        %p165 = pneg %p38
        %p166 = pneg %p62
        %p167 = pneg %p59
        %p168 = pneg %p88
        %p169 = pneg %p85
        %s170 = sand.u32 %s75, 1
        %s171 = scalar_lea.sflag [#allocation4], %s170
        %s172 = sand.u32 %s75, 1
        %s173 = smul.addr %s172, 4
        %s174 = scalar_lea.vmem [#allocation7], %s173
        %v175 = vld [vmem:[%s150] sm:$0xff]
        %v176 = vld [vmem:[#allocation5] sm:$0xff]
        %v177 = vld [vmem:[#allocation5 + $0x8] sm:$0xff]
        %v178 = vld [vmem:[#allocation5 + $0x10] sm:$0xff]
        %v179 = vld [vmem:[#allocation5 + $0x18] sm:$0xff]
        %v180 = vld [vmem:[#allocation5 + $0x20] sm:$0xff]
        %v181 = vld [vmem:[#allocation5 + $0x28] sm:$0xff]
        %v182 = vld [vmem:[#allocation5 + $0x30] sm:$0xff]
        %v183 = vld [vmem:[#allocation5 + $0x38] sm:$0xff]
        %v184 = vld [vmem:[#allocation5 + $0x40] sm:$0xff]
        %v185 = vld [vmem:[#allocation5 + $0x48] sm:$0xff]
        %v186 = vld [vmem:[#allocation5 + $0x50] sm:$0xff]
        %v187 = vld [vmem:[#allocation5 + $0x58] sm:$0xff]
        %v188 = vld [vmem:[#allocation5 + $0x60] sm:$0xff]
        %v189 = vld [vmem:[#allocation5 + $0x68] sm:$0xff]
        %v190 = vld [vmem:[#allocation5 + $0x70] sm:$0xff]
        %v191 = vld [vmem:[#allocation5 + $0x78] sm:$0xff]
        %v192 = vld [vmem:[#allocation5 + $0x80] sm:$0xff]
        %v193 = vld [vmem:[#allocation5 + $0x88] sm:$0xff]
        %v194 = vld [vmem:[#allocation5 + $0x90] sm:$0xff]
        %v195 = vld [vmem:[#allocation5 + $0x98] sm:$0xff]
        %v196 = vld [vmem:[#allocation5 + $0xa0] sm:$0xff]
        %v197 = vld [vmem:[#allocation5 + $0xa8] sm:$0xff]
        %v198 = vld [vmem:[#allocation5 + $0xb0] sm:$0xff]
        %v199 = vld [vmem:[#allocation5 + $0xb8] sm:$0xff]
        %v200 = vld [vmem:[#allocation5 + $0xc0] sm:$0xff]
        %v201 = vld [vmem:[#allocation5 + $0xc8] sm:$0xff]
        %v202 = vld [vmem:[#allocation5 + $0xd0] sm:$0xff]
        %v203 = vld [vmem:[#allocation5 + $0xd8] sm:$0xff]
        %v204 = vld [vmem:[#allocation5 + $0xe0] sm:$0xff]
        %v205 = vld [vmem:[#allocation5 + $0xe8] sm:$0xff]
        %v206 = vld [vmem:[#allocation5 + $0xf0] sm:$0xff]
        %v207 = vld [vmem:[#allocation5 + $0xf8] sm:$0xff]
        %v208 = vld [vmem:[#allocation5 + $0x100] sm:$0xff]
        %v209 = vld [vmem:[#allocation5 + $0x108] sm:$0xff]
        %v210 = vld [vmem:[#allocation5 + $0x110] sm:$0xff]
        %v211 = vld [vmem:[#allocation5 + $0x118] sm:$0xff]
        %v212 = vld [vmem:[#allocation5 + $0x120] sm:$0xff]
        %v213 = vld [vmem:[#allocation5 + $0x128] sm:$0xff]
        %v214 = vld [vmem:[#allocation5 + $0x130] sm:$0xff]
        %v215 = vld [vmem:[#allocation5 + $0x138] sm:$0xff]
        %v216 = vld [vmem:[#allocation5 + $0x140] sm:$0xff]
        %v217 = vld [vmem:[#allocation5 + $0x148] sm:$0xff]
        %v218 = vld [vmem:[#allocation5 + $0x150] sm:$0xff]
        %v219 = vld [vmem:[#allocation5 + $0x158] sm:$0xff]
        %v220 = vld [vmem:[#allocation5 + $0x160] sm:$0xff]
        %v221 = vld [vmem:[#allocation5 + $0x168] sm:$0xff]
        %v222 = vld [vmem:[#allocation5 + $0x170] sm:$0xff]
        %v223 = vld [vmem:[#allocation5 + $0x178] sm:$0xff]
        %v224 = vld [vmem:[#allocation5 + $0x180] sm:$0xff]
        %v225 = vld [vmem:[#allocation5 + $0x188] sm:$0xff]
        %v226 = vld [vmem:[#allocation5 + $0x190] sm:$0xff]
        %v227 = vld [vmem:[#allocation5 + $0x198] sm:$0xff]
        %v228 = vld [vmem:[#allocation5 + $0x1a0] sm:$0xff]
        %v229 = vld [vmem:[#allocation5 + $0x1a8] sm:$0xff]
        %v230 = vld [vmem:[#allocation5 + $0x1b0] sm:$0xff]
        %v231 = vld [vmem:[#allocation5 + $0x1b8] sm:$0xff]
        %v232 = vld [vmem:[#allocation5 + $0x1c0] sm:$0xff]
        %v233 = vld [vmem:[#allocation5 + $0x1c8] sm:$0xff]
        %v234 = vld [vmem:[#allocation5 + $0x1d0] sm:$0xff]
        %v235 = vld [vmem:[#allocation5 + $0x1d8] sm:$0xff]
        %v236 = vld [vmem:[#allocation5 + $0x1e0] sm:$0xff]
        %v237 = vld [vmem:[#allocation5 + $0x1e8] sm:$0xff]
        %v238 = vld [vmem:[#allocation5 + $0x1f0] sm:$0xff]
        %v239 = vld [vmem:[#allocation5 + $0x1f8] sm:$0xff]
        %v241 = vcombine.high %v175, %v175
        %v243 = vunpack.c.l.s4 1983009808
        %v244 = vunpack.c.0.s8 %v243
        %v245 = vlaneseq
        %v246 = vshrl.u32 %v245, 7
        %v247 = vsub.s32 %v244, %v246
        %v248 = vrot.slane %v175, %v247
        %v250 = vunpack.c.l.s4 1983009808
        %v251 = vunpack.c.0.s8 %v250
        %v252 = vlaneseq
        %v253 = vshrl.u32 %v252, 7
        %v254 = vsub.s32 %v251, %v253
        %v255 = vrot.slane %v241, %v254
        %v256 = vcombine.high %v248, %v248
        %v257 = vcombine.high %v255, %v255
        %262 = vmatprep.subr.mxu0 0.0
        %263 = vmatpush1.msra.mxu0 %v176
        %264 = vmatprep.subr.mxu0 0.0
        %265 = vmatpush1.msra.mxu0 %v177
        %266 = vmatprep.subr.mxu0 0.0
        %267 = vmatpush1.msra.mxu0 %v178
        %268 = vmatprep.subr.mxu0 0.0
        %269 = vmatpush1.msra.mxu0 %v179
        %270 = vmatprep.subr.mxu0 0.0
        %271 = vmatpush1.msra.mxu0 %v180
        %272 = vmatprep.subr.mxu0 0.0
        %273 = vmatpush1.msra.mxu0 %v181
        %274 = vmatprep.subr.mxu0 0.0
        %275 = vmatpush1.msra.mxu0 %v182
        %276 = vmatprep.subr.mxu0 0.0
        %277 = vmatpush1.msra.mxu0 %v183
        %278 = vmatprep.subr.mxu0 0.0
        %279 = vmatpush1.msra.mxu0 %v184
        %280 = vmatprep.subr.mxu0 0.0
        %281 = vmatpush1.msra.mxu0 %v185
        %282 = vmatprep.subr.mxu0 0.0
        %283 = vmatpush1.msra.mxu0 %v186
        %284 = vmatprep.subr.mxu0 0.0
        %285 = vmatpush1.msra.mxu0 %v187
        %286 = vmatprep.subr.mxu0 0.0
        %287 = vmatpush1.msra.mxu0 %v188
        %288 = vmatprep.subr.mxu0 0.0
        %289 = vmatpush1.msra.mxu0 %v189
        %290 = vmatprep.subr.mxu0 0.0
        %291 = vmatpush1.msra.mxu0 %v190
        %292 = vmatprep.subr.mxu0 0.0
        %293 = vmatpush1.msra.mxu0 %v191
        %294 = vmatprep.subr.mxu0 0.0
        %295 = vmatpush1.msra.mxu0 %v192
        %296 = vmatprep.subr.mxu0 0.0
        %297 = vmatpush1.msra.mxu0 %v193
        %298 = vmatprep.subr.mxu0 0.0
        %299 = vmatpush1.msra.mxu0 %v194
        %300 = vmatprep.subr.mxu0 0.0
        %301 = vmatpush1.msra.mxu0 %v195
        %302 = vmatprep.subr.mxu0 0.0
        %303 = vmatpush1.msra.mxu0 %v196
        %304 = vmatprep.subr.mxu0 0.0
        %305 = vmatpush1.msra.mxu0 %v197
        %306 = vmatprep.subr.mxu0 0.0
        %307 = vmatpush1.msra.mxu0 %v198
        %308 = vmatprep.subr.mxu0 0.0
        %309 = vmatpush1.msra.mxu0 %v199
        %310 = vmatprep.subr.mxu0 0.0
        %311 = vmatpush1.msra.mxu0 %v200
        %312 = vmatprep.subr.mxu0 0.0
        %313 = vmatpush1.msra.mxu0 %v201
        %314 = vmatprep.subr.mxu0 0.0
        %315 = vmatpush1.msra.mxu0 %v202
        %316 = vmatprep.subr.mxu0 0.0
        %317 = vmatpush1.msra.mxu0 %v203
        %318 = vmatprep.subr.mxu0 0.0
        %319 = vmatpush1.msra.mxu0 %v204
        %320 = vmatprep.subr.mxu0 0.0
        %321 = vmatpush1.msra.mxu0 %v205
        %322 = vmatprep.subr.mxu0 0.0
        %323 = vmatpush1.msra.mxu0 %v206
        %324 = vmatprep.subr.mxu0 0.0
        %325 = vmatpush1.msra.mxu0 %v207
        %326 = vmatprep.mubr.f32.mxu0 %v256
        %327 = vmatmul.mubr.f32.gmra.mrb[0].mxu0 %v248
        %v328 = vpop.f32.mrb[0].mxu0
        %v329 = vadd.f32 0.0, %v328
        %v330 = vpop.f32.mrb[0].mxu0
        %331 = vdwg.mxu0
        %332 = vmatprep.subr.mxu0 0.0
        %333 = vmatpush1.msra.mxu0 %v208
        %334 = vmatprep.subr.mxu0 0.0
        %335 = vmatpush1.msra.mxu0 %v209
        %336 = vmatprep.subr.mxu0 0.0
        %337 = vmatpush1.msra.mxu0 %v210
        %338 = vmatprep.subr.mxu0 0.0
        %339 = vmatpush1.msra.mxu0 %v211
        %340 = vmatprep.subr.mxu0 0.0
        %341 = vmatpush1.msra.mxu0 %v212
        %342 = vmatprep.subr.mxu0 0.0
        %343 = vmatpush1.msra.mxu0 %v213
        %344 = vmatprep.subr.mxu0 0.0
        %345 = vmatpush1.msra.mxu0 %v214
        %346 = vmatprep.subr.mxu0 0.0
        %347 = vmatpush1.msra.mxu0 %v215
        %348 = vmatprep.subr.mxu0 0.0
        %349 = vmatpush1.msra.mxu0 %v216
        %350 = vmatprep.subr.mxu0 0.0
        %351 = vmatpush1.msra.mxu0 %v217
        %352 = vmatprep.subr.mxu0 0.0
        %353 = vmatpush1.msra.mxu0 %v218
        %354 = vmatprep.subr.mxu0 0.0
        %355 = vmatpush1.msra.mxu0 %v219
        %356 = vmatprep.subr.mxu0 0.0
        %357 = vmatpush1.msra.mxu0 %v220
        %358 = vmatprep.subr.mxu0 0.0
        %359 = vmatpush1.msra.mxu0 %v221
        %360 = vmatprep.subr.mxu0 0.0
        %361 = vmatpush1.msra.mxu0 %v222
        %362 = vmatprep.subr.mxu0 0.0
        %363 = vmatpush1.msra.mxu0 %v223
        %364 = vmatprep.subr.mxu0 0.0
        %365 = vmatpush1.msra.mxu0 %v224
        %366 = vmatprep.subr.mxu0 0.0
        %367 = vmatpush1.msra.mxu0 %v225
        %368 = vmatprep.subr.mxu0 0.0
        %369 = vmatpush1.msra.mxu0 %v226
        %370 = vmatprep.subr.mxu0 0.0
        %371 = vmatpush1.msra.mxu0 %v227
        %372 = vmatprep.subr.mxu0 0.0
        %373 = vmatpush1.msra.mxu0 %v228
        %374 = vmatprep.subr.mxu0 0.0
        %375 = vmatpush1.msra.mxu0 %v229
        %376 = vmatprep.subr.mxu0 0.0
        %377 = vmatpush1.msra.mxu0 %v230
        %378 = vmatprep.subr.mxu0 0.0
        %379 = vmatpush1.msra.mxu0 %v231
        %380 = vmatprep.subr.mxu0 0.0
        %381 = vmatpush1.msra.mxu0 %v232
        %382 = vmatprep.subr.mxu0 0.0
        %383 = vmatpush1.msra.mxu0 %v233
        %384 = vmatprep.subr.mxu0 0.0
        %385 = vmatpush1.msra.mxu0 %v234
        %386 = vmatprep.subr.mxu0 0.0
        %387 = vmatpush1.msra.mxu0 %v235
        %388 = vmatprep.subr.mxu0 0.0
        %389 = vmatpush1.msra.mxu0 %v236
        %390 = vmatprep.subr.mxu0 0.0
        %391 = vmatpush1.msra.mxu0 %v237
        %392 = vmatprep.subr.mxu0 0.0
        %393 = vmatpush1.msra.mxu0 %v238
        %394 = vmatprep.subr.mxu0 0.0
        %395 = vmatpush1.msra.mxu0 %v239
        %396 = vmatprep.mubr.f32.mxu0 %v257
        %397 = vmatmul.mubr.f32.gmra.mrb[0].mxu0 %v255
        %v398 = vpop.f32.mrb[0].mxu0
        %v399 = vadd.f32 %v329, %v398
        %v400 = vpop.f32.mrb[0].mxu0
        %401 = vdwg.mxu0
        %402 = vst [vmem:[%s174] sm:$0x1] 0.0
        %403 = vst [vmem:[%s174 + $0x1] sm:$0x3] %v399
        %404 = vst [vmem:[%s174 + $0x3] sm:$0x1] 0.0
        %s405 = sand.u32 %s75, 1
        %s406 = scalar_lea.sflag [#allocation4], %s405
        %s407 = sand.u32 %s75, 1
        %s408 = smul.addr %s407, 4
        %s409 = scalar_lea.vmem [#allocation7], %s408
        // Predicated region
        $region37: #{tpu_custom_call.1} parent=27 // pred_check
          %p410 = pneg %p85
        $region38: #{tpu_custom_call.1} parent=27 // pred_check_branch
          %412 = sbr.rel (%p410) target = $region40
        $region39: #{tpu_custom_call.1} parent=27 // pred_region
          %s414 = ssub.s32 64, 64
          %415 = vsyncadd %s406, %s414
          %s416 = smul.addr %s20, 64
          %s417 = scalar_lea.hbm %s2, %s416
          %s419 = sshll.u32 %s409, 4
          %s420 = int_to_ptr.vmem [resolvable:$true] %s419
          %422 = dma.vmem_to_hbm [thread:$0]  %s420, 64, %s417, %s406
        $region40: #{tpu_custom_call.1} parent=27 // pred_fallthru
          _
      $region28: #{tpu_custom_call.1} parent=5 // pred_fallthru
        _
      %p423 = scmp.le.s32.totalorder 2, %s15
      // Predicated region
      $region41: #{tpu_custom_call.1} parent=5 // pred_check
        %p424 = pneg %p423
      $region42: #{tpu_custom_call.1} parent=5 // pred_check_branch
        %426 = sbr.rel (%p424) target = $region44
      $region43: #{tpu_custom_call.1} parent=5 // pred_region
        %s427 = ssub.s32 %s15, 2
        // Predicated region
        $region45: #{tpu_custom_call.1} parent=43 // pred_check
          %p428 = pneg %p91
        $region46: #{tpu_custom_call.1} parent=43 // pred_check_branch
          %430 = sbr.rel (%p428) target = $region48
        $region47: #{tpu_custom_call.1} parent=43 // pred_region
          %s431 = sand.u32 %s76, 1
          %s432 = scalar_lea.sflag [#allocation4], %s431
          %s433 = sand.u32 %s76, 1
          %s434 = smul.addr %s433, 4
          %s435 = scalar_lea.vmem [#allocation7], %s434
          %436 = dma.done %s432, 64
        $region48: #{tpu_custom_call.1} parent=43 // pred_fallthru
          _
      $region44: #{tpu_custom_call.1} parent=5 // pred_fallthru
        _
    $region6: #{tpu_custom_call.1} parent=1 // loop_footer
      %s19 = sadd.s32 1, %s15
    $region7: #{tpu_custom_call.1} parent=1 // loop_footer_branch
      %14 = sbr.rel target = $region3
    $region8: #{tpu_custom_call.1} parent=1 // loop_exit
      _
    %437 = vsyncpa [#allocation3], 1
    %s438 = scalar_lea.sflag [#allocation3], 1
    %439 = vsyncpa %s438, 1
    %440 = vsyncpa [#allocation6], 1
    %441 = vsyncpa [#allocation4], 1
    %s442 = scalar_lea.sflag [#allocation4], 1
    %443 = vsyncpa %s442, 1

</llo_original>
